<compile_context>
chip_gen: v5e
topology: v5e:2x2
jax: 0.10.0
libtpu: 0.0.40
codegen_flags: <defaults>
</compile_context>

<pallas_src>
import functools

import jax
import jax.numpy as jnp
from jax.experimental import pallas as pl
from jax.experimental.pallas import tpu as pltpu


_MAX_WEIGHT_BLOCK = 8   # samples/step, weight kernel (caps host-eps VMEM on v5e, trace size)
_MAX_LOCAL_BLOCK = 32   # samples/step, local-reparam kernel (S*Bp up to 256 MXU rows)


def _round_up(v, m):
    return ((v + m - 1) // m) * m


def _ceil_div(a, b):
    return -(-a // b)


def _split_samples(n_samples, max_block):
    """Pick (samples-per-step S, grid length).  Keep >= 2 grid steps whenever there are
    >= 2 samples so the "parallel" grid axis can use both TensorCores on v7x."""
    n_blocks = max(min(n_samples, 2), _ceil_div(n_samples, max_block))
    s = _ceil_div(n_samples, n_blocks)
    return s, n_blocks


# --------------------------------------------------------------------------------------
# Kernels
# --------------------------------------------------------------------------------------
def _bnn_weight_kernel(seed_ref, x_ref, *refs, n_layers, n_block, inkernel_rng):
    """Faithful weight-space sampling: n_block independent Monte-Carlo weight draws per
    grid step; within one draw the whole batch shares the sampled weights (exactly like
    BayesianLinear.forward).

    refs layout (after x_ref), per layer:
        w_mu  [d_in, d_out]   (stored as W^T of the PyTorch layer, zero-padded)
        w_std [d_in, d_out]   (softplus already applied once on the host, zero-padded)
        b_mu  [1, d_out]
        b_std [1, d_out]
        (+ eps_w [S, d_in, d_out], eps_b [S, 1, d_out]   iff not inkernel_rng)
    followed by the output ref o_ref [S, Bp, d_out_last].
    """
    per = 4 if inkernel_rng else 6
    o_ref = refs[-1]
    prefs = refs[:-1]
    assert len(prefs) == per * n_layers

    if inkernel_rng:
        # Non-additive (seed, sample-block) mixing -> independent streams per pair.
        pltpu.prng_seed(seed_ref[0], pl.program_id(0))

    x = x_ref[...]                                          # [Bp, d_in0], f32
    for j in range(n_block):                                # unrolled: S samples / step
        h = x
        for i in range(n_layers):
            base = per * i
            w_mu = prefs[base][...]
            w_std = prefs[base + 1][...]
            b_mu = prefs[base + 2][...]
            b_std = prefs[base + 3][...]
            if inkernel_rng:
                eps_w = pltpu.stateful_normal(w_mu.shape, jnp.float32)
                # draw a sublane-aligned (8, d_out) block and keep one row for the bias
                eps_b = pltpu.stateful_normal((8, b_mu.shape[1]), jnp.float32)[:1]
            else:
                eps_w = prefs[base + 4][j]                  # [d_in, d_out]
                eps_b = prefs[base + 5][j]                  # [1, d_out]

            w = w_mu + w_std * eps_w                        # reparameterization trick
            b = b_mu + b_std * eps_b
            h = jnp.dot(h, w, preferred_element_type=jnp.float32) + b
            if i < n_layers - 1:
                h = jnp.maximum(h, 0.0)                     # ReLU on hidden layers
            # TODO(synk): training-mode nn.Dropout omitted (eval-mode identity).
        o_ref[j] = h.astype(o_ref.dtype)


def _bnn_local_kernel(seed_ref, x_ref, *refs, n_layers, n_block, inkernel_rng):
    """Local-reparameterization sampling: noise is drawn in activation space, weights
    are shared per grid step, and the S samples of the block are stacked along the MXU
    M dimension (rows = S * Bp) so the heavy O(d_in*d_out) work is real matmuls."""
    per = 4 if inkernel_rng else 5
    o_ref = refs[-1]
    prefs = refs[:-1]
    assert len(prefs) == per * n_layers

    if inkernel_rng:
        pltpu.prng_seed(seed_ref[0], pl.program_id(0))

    x = x_ref[...]                                          # [Bp, d_in0]
    # All samples of this block share the input -> stack along rows (M dim).
    h = jnp.tile(x, (n_block, 1)) if n_block > 1 else x     # [S*Bp, d_in0]
    for i in range(n_layers):
        base = per * i
        w_mu = prefs[base][...]
        w_var = prefs[base + 1][...]                        # softplus(sigma)^2, host-side
        b_mu = prefs[base + 2][...]
        b_var = prefs[base + 3][...]
        m = jnp.dot(h, w_mu, preferred_element_type=jnp.float32) + b_mu
        v = jnp.dot(h * h, w_var, preferred_element_type=jnp.float32) + b_var
        if inkernel_rng:
            eps = pltpu.stateful_normal(m.shape, jnp.float32)
        else:
            eps = prefs[base + 4][0]                        # [S*Bp, d_out]
        h = m + jnp.sqrt(v) * eps
        if i < n_layers - 1:
            h = jnp.maximum(h, 0.0)
        # TODO(synk): training-mode nn.Dropout omitted (eval-mode identity).
    o_ref[0] = h.astype(o_ref.dtype)


# --------------------------------------------------------------------------------------
# One-time feature probe for the in-kernel TPU PRNG (decided once per process, so the
# RNG path never silently flips between calls).
# --------------------------------------------------------------------------------------
_INKERNEL_RNG = None


def _inkernel_rng_available():
    global _INKERNEL_RNG
    if _INKERNEL_RNG is None:
        def probe_kernel(o_ref):
            pltpu.prng_seed(1234, 5678)
            o_ref[...] = pltpu.stateful_normal(o_ref.shape, jnp.float32)

        try:
            z = pl.pallas_call(
                probe_kernel,
                out_shape=jax.ShapeDtypeStruct((8, 128), jnp.float32),
            )()
            _INKERNEL_RNG = bool(jnp.all(jnp.isfinite(jax.block_until_ready(z))))
        except Exception:
            _INKERNEL_RNG = False
    return _INKERNEL_RNG


# --------------------------------------------------------------------------------------
# pallas_call wrappers (jitted)
# --------------------------------------------------------------------------------------
def _param_specs(pin, pout):
    # Grid-invariant params: constant index_map -> the pipeline only DMAs them once.
    # Their double-buffered VMEM footprint is ~1.5 MiB, so no pipeline_mode override.
    return [
        pl.BlockSpec((pin, pout), lambda s, sd: (0, 0)),
        pl.BlockSpec((pin, pout), lambda s, sd: (0, 0)),
        pl.BlockSpec((1, pout), lambda s, sd: (0, 0)),
        pl.BlockSpec((1, pout), lambda s, sd: (0, 0)),
    ]


def _apply_weight(layers, x_p, seed, n_samples, inkernel_rng):
    bp = x_p.shape[0]
    pout_last = layers[-1]["w_mu"].shape[1]
    n_layers = len(layers)
    s_blk, n_blocks = _split_samples(n_samples, _MAX_WEIGHT_BLOCK)
    n_pad = s_blk * n_blocks

    inputs = [x_p]
    in_specs = [pl.BlockSpec(x_p.shape, lambda s, sd: (0, 0))]
    key = None if inkernel_rng else jax.random.PRNGKey(seed)

    for li, layer in enumerate(layers):
        pin, pout = layer["w_mu"].shape
        inputs += [layer["w_mu"], layer["w_std"], layer["b_mu"], layer["b_std"]]
        in_specs += _param_specs(pin, pout)
        if not inkernel_rng:
            kw, kb = jax.random.split(jax.random.fold_in(key, li))
            inputs += [jax.random.normal(kw, (n_pad, pin, pout), jnp.float32),
                       jax.random.normal(kb, (n_pad, 1, pout), jnp.float32)]
            in_specs += [pl.BlockSpec((s_blk, pin, pout), lambda s, sd: (s, 0, 0)),
                         pl.BlockSpec((s_blk, 1, pout), lambda s, sd: (s, 0, 0))]

    kernel = functools.partial(_bnn_weight_kernel, n_layers=n_layers,
                               n_block=s_blk, inkernel_rng=inkernel_rng)
    seed_arr = jnp.reshape(jnp.asarray(seed, jnp.int32), (1,))
    return pl.pallas_call(
        kernel,
        out_shape=jax.ShapeDtypeStruct((n_pad, bp, pout_last), jnp.float32),
        grid_spec=pltpu.PrefetchScalarGridSpec(
            num_scalar_prefetch=1,
            grid=(n_blocks,),
            in_specs=in_specs,
            out_specs=pl.BlockSpec((s_blk, bp, pout_last), lambda s, sd: (s, 0, 0)),
        ),
        compiler_params=pltpu.CompilerParams(
            dimension_semantics=("parallel",)),   # shard sample blocks over v7x's 2 TCs
    )(seed_arr, *inputs)


def _apply_local(layers, x_p, seed, n_samples, inkernel_rng):
    bp = x_p.shape[0]
    pout_last = layers[-1]["w_mu"].shape[1]
    n_layers = len(layers)
    s_blk, n_blocks = _split_samples(n_samples, _MAX_LOCAL_BLOCK)
    rows = s_blk * bp                              # samples stacked along the MXU M dim
    n_pad = s_blk * n_blocks

    inputs = [x_p]
    in_specs = [pl.BlockSpec(x_p.shape, lambda s, sd: (0, 0))]
    key = None if inkernel_rng else jax.random.PRNGKey(seed)

    for li, layer in enumerate(layers):
        pin, pout = layer["w_mu"].shape
        inputs += [layer["w_mu"], layer["w_var"], layer["b_mu"], layer["b_var"]]
        in_specs += _param_specs(pin, pout)
        if not inkernel_rng:
            k = jax.random.fold_in(key, li)
            inputs.append(jax.random.normal(k, (n_blocks, rows, pout), jnp.float32))
            in_specs.append(pl.BlockSpec((1, rows, pout), lambda s, sd: (s, 0, 0)))

    kernel = functools.partial(_bnn_local_kernel, n_layers=n_layers,
                               n_block=s_blk, inkernel_rng=inkernel_rng)
    seed_arr = jnp.reshape(jnp.asarray(seed, jnp.int32), (1,))
    out = pl.pallas_call(
        kernel,
        out_shape=jax.ShapeDtypeStruct((n_blocks, rows, pout_last), jnp.float32),
        grid_spec=pltpu.PrefetchScalarGridSpec(
            num_scalar_prefetch=1,
            grid=(n_blocks,),
            in_specs=in_specs,
            out_specs=pl.BlockSpec((1, rows, pout_last), lambda s, sd: (s, 0, 0)),
        ),
        compiler_params=pltpu.CompilerParams(
            dimension_semantics=("parallel",)),
    )(seed_arr, *inputs)
    return out.reshape(n_pad, bp, pout_last)


@functools.partial(jax.jit,
                   static_argnames=("n_samples", "method", "out_dim", "inkernel_rng"))
def _bnn_apply_jit(layers, x, seed, *, n_samples, method, out_dim, inkernel_rng):
    batch, d_in = x.shape
    bp = _round_up(max(batch, 8), 8)                     # f32 sublane multiple
    din_p = layers[0]["w_mu"].shape[0]
    x_p = jnp.zeros((bp, din_p), jnp.float32).at[:batch, :d_in].set(
        x.astype(jnp.float32))
    if method == "weight":
        out = _apply_weight(layers, x_p, seed, n_samples, inkernel_rng)
    elif method == "local":
        out = _apply_local(layers, x_p, seed, n_samples, inkernel_rng)
    else:
        raise ValueError(f"unknown method: {method}")
    # Strip sample / batch / lane padding (padded output columns are exactly zero).
    return out[:n_samples, :batch, :out_dim]


# --------------------------------------------------------------------------------------
# Public API
# --------------------------------------------------------------------------------------
def bayesian_nn_apply(prep, x, seed, n_samples=1, method="weight"):
    """Run the fused BayesianNN for n_samples independent draws.

    x: [batch, in_dim] -> [n_samples, batch, out_dim].
    method="weight": faithful per-sample weight draws (weights shared across the batch,
                     exactly the PyTorch module's forward semantics).
    method="local" : local-reparameterization (activation-space noise, MXU-shaped);
                     per-row output distribution is identical.  Used for MC predict().
    """
    layers, out_dim = prep
    return _bnn_apply_jit(layers, x, jnp.asarray(seed, jnp.int32),
                          n_samples=int(n_samples), method=method, out_dim=out_dim,
                          inkernel_rng=_inkernel_rng_available())


def bayesian_nn_forward(prep, x, seed):
    """Single stochastic forward pass (== BayesianNN.forward): [batch, out_dim]."""
    return bayesian_nn_apply(prep, x, seed, n_samples=1, method="weight")[0]


def bayesian_nn_predict(prep, x, seed, n_samples=100):
    """Monte-Carlo mean/std of predictions for one input row (== BayesianNN.predict).
    Uses the local-reparameterization kernel: for a single row it is exactly
    distribution-equivalent to weight-space sampling and runs MXU-bound."""
    preds = bayesian_nn_apply(prep, x, seed, n_samples=n_samples, method="local")
    preds = preds[:, 0, :]                                    # [n_samples, out_dim]
    return preds.mean(axis=0), preds.std(axis=0, ddof=1)      # torch.std default: ddof=1


# --------------------------------------------------------------------------------------
# Parameter construction (matches the statistics of the PyTorch constructor)
# --------------------------------------------------------------------------------------
def init_bayesian_linear(key, in_dim, out_dim):
    """Matches the PyTorch BayesianLinear constructor statistics.  Weights are stored
    pre-transposed as [in_dim, out_dim] (= W^T) so the kernel matmul needs no transpose;
    the Gaussian init is symmetric, so statistics are unchanged."""
    k1, k2, k3, k4 = jax.random.split(key, 4)
    rho0 = jnp.log(jnp.expm1(jnp.float32(0.1)))               # log(exp(0.1) - 1)
    return dict(
        w_mu=0.1 * jax.random.normal(k1, (in_dim, out_dim), jnp.float32),
        w_sigma=rho0 + 0.1 * jax.random.normal(k2, (in_dim, out_dim), jnp.float32),
        b_mu=0.1 * jax.random.normal(k3, (out_dim,), jnp.float32),
        b_sigma=rho0 + 0.1 * jax.random.normal(k4, (out_dim,), jnp.float32),
    )


def precompute_padded_params(params):
    """Pad every width to a lane-dense multiple of 128 (input dim to a sublane multiple
    of 8) and precompute the eps-independent std = softplus(sigma) (and std^2 for the
    local-reparameterization path) ONCE on the host.

    Zero-padded mu/std rows/columns sample to exactly-zero weights, padded activations
    stay exactly zero through ReLU, and padded output columns are exactly zero, so
    slicing back to the logical out_dim is exact.  All math stays f32."""
    dims = [params[0]["w_mu"].shape[0]] + [p["w_mu"].shape[1] for p in params]
    pdims = [_round_up(dims[0], 8)] + [_round_up(d, 128) for d in dims[1:]]
    layers = []
    for i, p in enumerate(params):
        d_in, d_out = p["w_mu"].shape
        pin, pout = pdims[i], pdims[i + 1]
        w_mu = jnp.zeros((pin, pout), jnp.float32).at[:d_in, :d_out].set(p["w_mu"])
        w_std = jnp.zeros((pin, pout), jnp.float32).at[:d_in, :d_out].set(
            jax.nn.softplus(p["w_sigma"]))
        b_mu = jnp.zeros((1, pout), jnp.float32).at[0, :d_out].set(p["b_mu"])
        b_std = jnp.zeros((1, pout), jnp.float32).at[0, :d_out].set(
            jax.nn.softplus(p["b_sigma"]))
        layers.append(dict(w_mu=w_mu, w_std=w_std, w_var=w_std * w_std,
                           b_mu=b_mu, b_std=b_std, b_var=b_std * b_std))
    return tuple(layers), dims[-1]


# --------------------------------------------------------------------------------------
if __name__ == "__main__":
    batch, in_dim, out_dim = 2, 32, 8
    hidden_sizes = [256, 128, 64]
    dims = [in_dim] + hidden_sizes + [out_dim]

    root = jax.random.PRNGKey(0)
    k_x, k_p = jax.random.split(root)
    pkeys = jax.random.split(k_p, len(dims) - 1)
    params = [init_bayesian_linear(pk, di, do)
              for pk, di, do in zip(pkeys, dims[:-1], dims[1:])]
    prep = precompute_padded_params(params)

    x = jax.random.normal(k_x, (batch, in_dim), jnp.float32)

    # 1) Single stochastic forward pass (== BayesianNN.forward): weight-space sampling,
    #    one weight draw shared by the whole batch, exactly like the PyTorch module.
    out = jax.block_until_ready(bayesian_nn_forward(prep, x, seed=0))
    assert out.shape == (batch, out_dim), out.shape
    assert bool(jnp.all(jnp.isfinite(out)))

    # 2) Small MC run on the faithful weight-space kernel (S-blocked samples per step).
    mc_w = jax.block_until_ready(
        bayesian_nn_apply(prep, x[:1], seed=1, n_samples=4, method="weight"))
    assert mc_w.shape == (4, 1, out_dim), mc_w.shape
    assert bool(jnp.all(jnp.isfinite(mc_w)))

    # 3) MC predict (== BayesianNN.predict) on the MXU-shaped local-reparameterization
    #    kernel: samples stacked along M with weights shared per grid step.
    mean_pred, std_pred = bayesian_nn_predict(prep, x[:1], seed=2, n_samples=16)
    mean_pred = jax.block_until_ready(mean_pred)
    std_pred = jax.block_until_ready(std_pred)
    assert mean_pred.shape == (out_dim,) and std_pred.shape == (out_dim,)
    assert bool(jnp.all(jnp.isfinite(mean_pred)))
    assert bool(jnp.all(jnp.isfinite(std_pred)))

    print("KERNEL_OK")
</pallas_src>

<mosaic_0001>
module attributes {stable_mosaic.version = 11 : i64} {
  func.func @_bnn_weight_kernel(%arg0: i32, %arg1: memref<1xi32, #tpu.memory_space<smem>>, %arg2: memref<8x32xf32, #tpu.memory_space<vmem>>, %arg3: memref<32x256xf32, #tpu.memory_space<vmem>>, %arg4: memref<32x256xf32, #tpu.memory_space<vmem>>, %arg5: memref<1x256xf32, #tpu.memory_space<vmem>>, %arg6: memref<1x256xf32, #tpu.memory_space<vmem>>, %arg7: memref<1x32x256xf32, #tpu.memory_space<vmem>>, %arg8: memref<1x1x256xf32, #tpu.memory_space<vmem>>, %arg9: memref<256x128xf32, #tpu.memory_space<vmem>>, %arg10: memref<256x128xf32, #tpu.memory_space<vmem>>, %arg11: memref<1x128xf32, #tpu.memory_space<vmem>>, %arg12: memref<1x128xf32, #tpu.memory_space<vmem>>, %arg13: memref<1x256x128xf32, #tpu.memory_space<vmem>>, %arg14: memref<1x1x128xf32, #tpu.memory_space<vmem>>, %arg15: memref<128x128xf32, #tpu.memory_space<vmem>>, %arg16: memref<128x128xf32, #tpu.memory_space<vmem>>, %arg17: memref<1x128xf32, #tpu.memory_space<vmem>>, %arg18: memref<1x128xf32, #tpu.memory_space<vmem>>, %arg19: memref<1x128x128xf32, #tpu.memory_space<vmem>>, %arg20: memref<1x1x128xf32, #tpu.memory_space<vmem>>, %arg21: memref<128x128xf32, #tpu.memory_space<vmem>>, %arg22: memref<128x128xf32, #tpu.memory_space<vmem>>, %arg23: memref<1x128xf32, #tpu.memory_space<vmem>>, %arg24: memref<1x128xf32, #tpu.memory_space<vmem>>, %arg25: memref<1x128x128xf32, #tpu.memory_space<vmem>>, %arg26: memref<1x1x128xf32, #tpu.memory_space<vmem>>, %arg27: memref<1x8x128xf32, #tpu.memory_space<vmem>>) attributes {dimension_semantics = [#tpu.dimension_semantics<parallel>], iteration_bounds = array<i64: 1>, scalar_prefetch = 1 : i64, scratch_operands = 0 : i64, tpu.core_type = #tpu.core_type<tc>, window_params = [{pipeline_mode = #tpu.pipeline_mode<synchronous>, transform_indices = @transform_0, window_bounds = array<i64: 8, 32>}, {pipeline_mode = #tpu.pipeline_mode<synchronous>, transform_indices = @transform_1, window_bounds = array<i64: 32, 256>}, {pipeline_mode = #tpu.pipeline_mode<synchronous>, transform_indices = @transform_2, window_bounds = array<i64: 32, 256>}, {pipeline_mode = #tpu.pipeline_mode<synchronous>, transform_indices = @transform_3, window_bounds = array<i64: 1, 256>}, {pipeline_mode = #tpu.pipeline_mode<synchronous>, transform_indices = @transform_4, window_bounds = array<i64: 1, 256>}, {transform_indices = @transform_5, window_bounds = array<i64: 1, 32, 256>}, {transform_indices = @transform_6, window_bounds = array<i64: 1, 1, 256>}, {pipeline_mode = #tpu.pipeline_mode<synchronous>, transform_indices = @transform_7, window_bounds = array<i64: 256, 128>}, {pipeline_mode = #tpu.pipeline_mode<synchronous>, transform_indices = @transform_8, window_bounds = array<i64: 256, 128>}, {pipeline_mode = #tpu.pipeline_mode<synchronous>, transform_indices = @transform_9, window_bounds = array<i64: 1, 128>}, {pipeline_mode = #tpu.pipeline_mode<synchronous>, transform_indices = @transform_10, window_bounds = array<i64: 1, 128>}, {transform_indices = @transform_11, window_bounds = array<i64: 1, 256, 128>}, {transform_indices = @transform_12, window_bounds = array<i64: 1, 1, 128>}, {pipeline_mode = #tpu.pipeline_mode<synchronous>, transform_indices = @transform_13, window_bounds = array<i64: 128, 128>}, {pipeline_mode = #tpu.pipeline_mode<synchronous>, transform_indices = @transform_14, window_bounds = array<i64: 128, 128>}, {pipeline_mode = #tpu.pipeline_mode<synchronous>, transform_indices = @transform_15, window_bounds = array<i64: 1, 128>}, {pipeline_mode = #tpu.pipeline_mode<synchronous>, transform_indices = @transform_16, window_bounds = array<i64: 1, 128>}, {transform_indices = @transform_17, window_bounds = array<i64: 1, 128, 128>}, {transform_indices = @transform_18, window_bounds = array<i64: 1, 1, 128>}, {pipeline_mode = #tpu.pipeline_mode<synchronous>, transform_indices = @transform_19, window_bounds = array<i64: 128, 128>}, {pipeline_mode = #tpu.pipeline_mode<synchronous>, transform_indices = @transform_20, window_bounds = array<i64: 128, 128>}, {pipeline_mode = #tpu.pipeline_mode<synchronous>, transform_indices = @transform_21, window_bounds = array<i64: 1, 128>}, {pipeline_mode = #tpu.pipeline_mode<synchronous>, transform_indices = @transform_22, window_bounds = array<i64: 1, 128>}, {transform_indices = @transform_23, window_bounds = array<i64: 1, 128, 128>}, {transform_indices = @transform_24, window_bounds = array<i64: 1, 1, 128>}, {transform_indices = @transform_25, window_bounds = array<i64: 1, 8, 128>}]} {
    %c0 = arith.constant 0 : index
    %c0_0 = arith.constant 0 : index
    %0 = vector.load %arg2[%c0, %c0_0] : memref<8x32xf32, #tpu.memory_space<vmem>>, vector<8x32xf32>
    %c0_1 = arith.constant 0 : index
    %c0_2 = arith.constant 0 : index
    %1 = vector.load %arg3[%c0_1, %c0_2] : memref<32x256xf32, #tpu.memory_space<vmem>>, vector<32x256xf32>
    %c0_3 = arith.constant 0 : index
    %c0_4 = arith.constant 0 : index
    %2 = vector.load %arg4[%c0_3, %c0_4] : memref<32x256xf32, #tpu.memory_space<vmem>>, vector<32x256xf32>
    %c0_5 = arith.constant 0 : index
    %c0_6 = arith.constant 0 : index
    %3 = vector.load %arg5[%c0_5, %c0_6] : memref<1x256xf32, #tpu.memory_space<vmem>>, vector<1x256xf32>
    %c0_7 = arith.constant 0 : index
    %c0_8 = arith.constant 0 : index
    %4 = vector.load %arg6[%c0_7, %c0_8] : memref<1x256xf32, #tpu.memory_space<vmem>>, vector<1x256xf32>
    %c0_9 = arith.constant 0 : index
    %c0_10 = arith.constant 0 : index
    %c0_11 = arith.constant 0 : index
    %5 = vector.load %arg7[%c0_9, %c0_10, %c0_11] : memref<1x32x256xf32, #tpu.memory_space<vmem>>, vector<1x32x256xf32>
    %6 = vector.shape_cast %5 : vector<1x32x256xf32> to vector<32x256xf32>
    %c0_12 = arith.constant 0 : index
    %c0_13 = arith.constant 0 : index
    %c0_14 = arith.constant 0 : index
    %7 = vector.load %arg8[%c0_12, %c0_13, %c0_14] : memref<1x1x256xf32, #tpu.memory_space<vmem>>, vector<1x1x256xf32>
    %8 = vector.shape_cast %7 : vector<1x1x256xf32> to vector<1x256xf32>
    %9 = arith.mulf %2, %6 : vector<32x256xf32>
    %10 = arith.addf %1, %9 : vector<32x256xf32>
    %11 = arith.mulf %4, %8 : vector<1x256xf32>
    %12 = arith.addf %3, %11 : vector<1x256xf32>
    %cst = arith.constant dense<0.000000e+00> : vector<8x256xf32>
    %13 = tpu.matmul %0, %10, %cst {dimension_numbers = #tpu.dot_dimension_numbers<[1], [0], [0], [1], [0, 0, 1, 1], [], []>} : vector<8x32xf32>, vector<32x256xf32>, vector<8x256xf32> -> vector<8x256xf32>
    %14 = vector.broadcast %12 : vector<1x256xf32> to vector<8x256xf32>
    %15 = arith.addf %13, %14 : vector<8x256xf32>
    %cst_15 = arith.constant 0.000000e+00 : f32
    %16 = vector.broadcast %cst_15 : f32 to vector<8x256xf32>
    %17 = arith.maximumf %15, %16 : vector<8x256xf32>
    %c0_16 = arith.constant 0 : index
    %c0_17 = arith.constant 0 : index
    %18 = vector.load %arg9[%c0_16, %c0_17] : memref<256x128xf32, #tpu.memory_space<vmem>>, vector<256x128xf32>
    %c0_18 = arith.constant 0 : index
    %c0_19 = arith.constant 0 : index
    %19 = vector.load %arg10[%c0_18, %c0_19] : memref<256x128xf32, #tpu.memory_space<vmem>>, vector<256x128xf32>
    %c0_20 = arith.constant 0 : index
    %c0_21 = arith.constant 0 : index
    %20 = vector.load %arg11[%c0_20, %c0_21] : memref<1x128xf32, #tpu.memory_space<vmem>>, vector<1x128xf32>
    %c0_22 = arith.constant 0 : index
    %c0_23 = arith.constant 0 : index
    %21 = vector.load %arg12[%c0_22, %c0_23] : memref<1x128xf32, #tpu.memory_space<vmem>>, vector<1x128xf32>
    %c0_24 = arith.constant 0 : index
    %c0_25 = arith.constant 0 : index
    %c0_26 = arith.constant 0 : index
    %22 = vector.load %arg13[%c0_24, %c0_25, %c0_26] : memref<1x256x128xf32, #tpu.memory_space<vmem>>, vector<1x256x128xf32>
    %23 = vector.shape_cast %22 : vector<1x256x128xf32> to vector<256x128xf32>
    %c0_27 = arith.constant 0 : index
    %c0_28 = arith.constant 0 : index
    %c0_29 = arith.constant 0 : index
    %24 = vector.load %arg14[%c0_27, %c0_28, %c0_29] : memref<1x1x128xf32, #tpu.memory_space<vmem>>, vector<1x1x128xf32>
    %25 = vector.shape_cast %24 : vector<1x1x128xf32> to vector<1x128xf32>
    %26 = arith.mulf %19, %23 : vector<256x128xf32>
    %27 = arith.addf %18, %26 : vector<256x128xf32>
    %28 = arith.mulf %21, %25 : vector<1x128xf32>
    %29 = arith.addf %20, %28 : vector<1x128xf32>
    %cst_30 = arith.constant dense<0.000000e+00> : vector<8x128xf32>
    %30 = tpu.matmul %17, %27, %cst_30 {dimension_numbers = #tpu.dot_dimension_numbers<[1], [0], [0], [1], [0, 0, 1, 1], [], []>} : vector<8x256xf32>, vector<256x128xf32>, vector<8x128xf32> -> vector<8x128xf32>
    %31 = vector.broadcast %29 : vector<1x128xf32> to vector<8x128xf32>
    %32 = arith.addf %30, %31 : vector<8x128xf32>
    %cst_31 = arith.constant 0.000000e+00 : f32
    %33 = vector.broadcast %cst_31 : f32 to vector<8x128xf32>
    %34 = arith.maximumf %32, %33 : vector<8x128xf32>
    %c0_32 = arith.constant 0 : index
    %c0_33 = arith.constant 0 : index
    %35 = vector.load %arg15[%c0_32, %c0_33] : memref<128x128xf32, #tpu.memory_space<vmem>>, vector<128x128xf32>
    %c0_34 = arith.constant 0 : index
    %c0_35 = arith.constant 0 : index
    %36 = vector.load %arg16[%c0_34, %c0_35] : memref<128x128xf32, #tpu.memory_space<vmem>>, vector<128x128xf32>
    %c0_36 = arith.constant 0 : index
    %c0_37 = arith.constant 0 : index
    %37 = vector.load %arg17[%c0_36, %c0_37] : memref<1x128xf32, #tpu.memory_space<vmem>>, vector<1x128xf32>
    %c0_38 = arith.constant 0 : index
    %c0_39 = arith.constant 0 : index
    %38 = vector.load %arg18[%c0_38, %c0_39] : memref<1x128xf32, #tpu.memory_space<vmem>>, vector<1x128xf32>
    %c0_40 = arith.constant 0 : index
    %c0_41 = arith.constant 0 : index
    %c0_42 = arith.constant 0 : index
    %39 = vector.load %arg19[%c0_40, %c0_41, %c0_42] : memref<1x128x128xf32, #tpu.memory_space<vmem>>, vector<1x128x128xf32>
    %40 = vector.shape_cast %39 : vector<1x128x128xf32> to vector<128x128xf32>
    %c0_43 = arith.constant 0 : index
    %c0_44 = arith.constant 0 : index
    %c0_45 = arith.constant 0 : index
    %41 = vector.load %arg20[%c0_43, %c0_44, %c0_45] : memref<1x1x128xf32, #tpu.memory_space<vmem>>, vector<1x1x128xf32>
    %42 = vector.shape_cast %41 : vector<1x1x128xf32> to vector<1x128xf32>
    %43 = arith.mulf %36, %40 : vector<128x128xf32>
    %44 = arith.addf %35, %43 : vector<128x128xf32>
    %45 = arith.mulf %38, %42 : vector<1x128xf32>
    %46 = arith.addf %37, %45 : vector<1x128xf32>
    %cst_46 = arith.constant dense<0.000000e+00> : vector<8x128xf32>
    %47 = tpu.matmul %34, %44, %cst_46 {dimension_numbers = #tpu.dot_dimension_numbers<[1], [0], [0], [1], [0, 0, 1, 1], [], []>} : vector<8x128xf32>, vector<128x128xf32>, vector<8x128xf32> -> vector<8x128xf32>
    %48 = vector.broadcast %46 : vector<1x128xf32> to vector<8x128xf32>
    %49 = arith.addf %47, %48 : vector<8x128xf32>
    %cst_47 = arith.constant 0.000000e+00 : f32
    %50 = vector.broadcast %cst_47 : f32 to vector<8x128xf32>
    %51 = arith.maximumf %49, %50 : vector<8x128xf32>
    %c0_48 = arith.constant 0 : index
    %c0_49 = arith.constant 0 : index
    %52 = vector.load %arg21[%c0_48, %c0_49] : memref<128x128xf32, #tpu.memory_space<vmem>>, vector<128x128xf32>
    %c0_50 = arith.constant 0 : index
    %c0_51 = arith.constant 0 : index
    %53 = vector.load %arg22[%c0_50, %c0_51] : memref<128x128xf32, #tpu.memory_space<vmem>>, vector<128x128xf32>
    %c0_52 = arith.constant 0 : index
    %c0_53 = arith.constant 0 : index
    %54 = vector.load %arg23[%c0_52, %c0_53] : memref<1x128xf32, #tpu.memory_space<vmem>>, vector<1x128xf32>
    %c0_54 = arith.constant 0 : index
    %c0_55 = arith.constant 0 : index
    %55 = vector.load %arg24[%c0_54, %c0_55] : memref<1x128xf32, #tpu.memory_space<vmem>>, vector<1x128xf32>
    %c0_56 = arith.constant 0 : index
    %c0_57 = arith.constant 0 : index
    %c0_58 = arith.constant 0 : index
    %56 = vector.load %arg25[%c0_56, %c0_57, %c0_58] : memref<1x128x128xf32, #tpu.memory_space<vmem>>, vector<1x128x128xf32>
    %57 = vector.shape_cast %56 : vector<1x128x128xf32> to vector<128x128xf32>
    %c0_59 = arith.constant 0 : index
    %c0_60 = arith.constant 0 : index
    %c0_61 = arith.constant 0 : index
    %58 = vector.load %arg26[%c0_59, %c0_60, %c0_61] : memref<1x1x128xf32, #tpu.memory_space<vmem>>, vector<1x1x128xf32>
    %59 = vector.shape_cast %58 : vector<1x1x128xf32> to vector<1x128xf32>
    %60 = arith.mulf %53, %57 : vector<128x128xf32>
    %61 = arith.addf %52, %60 : vector<128x128xf32>
    %62 = arith.mulf %55, %59 : vector<1x128xf32>
    %63 = arith.addf %54, %62 : vector<1x128xf32>
    %cst_62 = arith.constant dense<0.000000e+00> : vector<8x128xf32>
    %64 = tpu.matmul %51, %61, %cst_62 {dimension_numbers = #tpu.dot_dimension_numbers<[1], [0], [0], [1], [0, 0, 1, 1], [], []>} : vector<8x128xf32>, vector<128x128xf32>, vector<8x128xf32> -> vector<8x128xf32>
    %65 = vector.broadcast %63 : vector<1x128xf32> to vector<8x128xf32>
    %66 = arith.addf %64, %65 : vector<8x128xf32>
    %c0_63 = arith.constant 0 : index
    %c0_64 = arith.constant 0 : index
    %c0_65 = arith.constant 0 : index
    %67 = vector.load %arg27[%c0_63, %c0_64, %c0_65] : memref<1x8x128xf32, #tpu.memory_space<vmem>>, vector<1x8x128xf32>
    %68 = vector.shape_cast %67 : vector<1x8x128xf32> to vector<8x128xf32>
    %69 = vector.shape_cast %66 : vector<8x128xf32> to vector<1x8x128xf32>
    tpu.vector_store %arg27[%c0_63, %c0_64, %c0_65], %69 {strides = array<i32>} : memref<1x8x128xf32, #tpu.memory_space<vmem>>, vector<1x8x128xf32>,
    return
  }
  func.func @transform_0(%arg0: i32, %arg1: memref<1xi32, #tpu.memory_space<smem>>) -> (i32, i32) {
    %c0_i32 = arith.constant 0 : i32
    %c0_i32_0 = arith.constant 0 : i32
    %c0_i32_1 = arith.constant 0 : i32
    return %c0_i32, %c0_i32_0 : i32, i32
  }
  func.func @transform_1(%arg0: i32, %arg1: memref<1xi32, #tpu.memory_space<smem>>) -> (i32, i32) {
    %c0_i32 = arith.constant 0 : i32
    %c0_i32_0 = arith.constant 0 : i32
    %c0_i32_1 = arith.constant 0 : i32
    return %c0_i32, %c0_i32_0 : i32, i32
  }
  func.func @transform_2(%arg0: i32, %arg1: memref<1xi32, #tpu.memory_space<smem>>) -> (i32, i32) {
    %c0_i32 = arith.constant 0 : i32
    %c0_i32_0 = arith.constant 0 : i32
    %c0_i32_1 = arith.constant 0 : i32
    return %c0_i32, %c0_i32_0 : i32, i32
  }
  func.func @transform_3(%arg0: i32, %arg1: memref<1xi32, #tpu.memory_space<smem>>) -> (i32, i32) {
    %c0_i32 = arith.constant 0 : i32
    %c0_i32_0 = arith.constant 0 : i32
    %c0_i32_1 = arith.constant 0 : i32
    return %c0_i32, %c0_i32_0 : i32, i32
  }
  func.func @transform_4(%arg0: i32, %arg1: memref<1xi32, #tpu.memory_space<smem>>) -> (i32, i32) {
    %c0_i32 = arith.constant 0 : i32
    %c0_i32_0 = arith.constant 0 : i32
    %c0_i32_1 = arith.constant 0 : i32
    return %c0_i32, %c0_i32_0 : i32, i32
  }
  func.func @transform_5(%arg0: i32, %arg1: memref<1xi32, #tpu.memory_space<smem>>) -> (i32, i32, i32) {
    %c0_i32 = arith.constant 0 : i32
    %c0_i32_0 = arith.constant 0 : i32
    %c0_i32_1 = arith.constant 0 : i32
    return %arg0, %c0_i32, %c0_i32_0 : i32, i32, i32
  }
  func.func @transform_6(%arg0: i32, %arg1: memref<1xi32, #tpu.memory_space<smem>>) -> (i32, i32, i32) {
    %c0_i32 = arith.constant 0 : i32
    %c0_i32_0 = arith.constant 0 : i32
    %c0_i32_1 = arith.constant 0 : i32
    return %arg0, %c0_i32, %c0_i32_0 : i32, i32, i32
  }
  func.func @transform_7(%arg0: i32, %arg1: memref<1xi32, #tpu.memory_space<smem>>) -> (i32, i32) {
    %c0_i32 = arith.constant 0 : i32
    %c0_i32_0 = arith.constant 0 : i32
    %c0_i32_1 = arith.constant 0 : i32
    return %c0_i32, %c0_i32_0 : i32, i32
  }
  func.func @transform_8(%arg0: i32, %arg1: memref<1xi32, #tpu.memory_space<smem>>) -> (i32, i32) {
    %c0_i32 = arith.constant 0 : i32
    %c0_i32_0 = arith.constant 0 : i32
    %c0_i32_1 = arith.constant 0 : i32
    return %c0_i32, %c0_i32_0 : i32, i32
  }
  func.func @transform_9(%arg0: i32, %arg1: memref<1xi32, #tpu.memory_space<smem>>) -> (i32, i32) {
    %c0_i32 = arith.constant 0 : i32
    %c0_i32_0 = arith.constant 0 : i32
    %c0_i32_1 = arith.constant 0 : i32
    return %c0_i32, %c0_i32_0 : i32, i32
  }
  func.func @transform_10(%arg0: i32, %arg1: memref<1xi32, #tpu.memory_space<smem>>) -> (i32, i32) {
    %c0_i32 = arith.constant 0 : i32
    %c0_i32_0 = arith.constant 0 : i32
    %c0_i32_1 = arith.constant 0 : i32
    return %c0_i32, %c0_i32_0 : i32, i32
  }
  func.func @transform_11(%arg0: i32, %arg1: memref<1xi32, #tpu.memory_space<smem>>) -> (i32, i32, i32) {
    %c0_i32 = arith.constant 0 : i32
    %c0_i32_0 = arith.constant 0 : i32
    %c0_i32_1 = arith.constant 0 : i32
    return %arg0, %c0_i32, %c0_i32_0 : i32, i32, i32
  }
  func.func @transform_12(%arg0: i32, %arg1: memref<1xi32, #tpu.memory_space<smem>>) -> (i32, i32, i32) {
    %c0_i32 = arith.constant 0 : i32
    %c0_i32_0 = arith.constant 0 : i32
    %c0_i32_1 = arith.constant 0 : i32
    return %arg0, %c0_i32, %c0_i32_0 : i32, i32, i32
  }
  func.func @transform_13(%arg0: i32, %arg1: memref<1xi32, #tpu.memory_space<smem>>) -> (i32, i32) {
    %c0_i32 = arith.constant 0 : i32
    %c0_i32_0 = arith.constant 0 : i32
    %c0_i32_1 = arith.constant 0 : i32
    return %c0_i32, %c0_i32_0 : i32, i32
  }
  func.func @transform_14(%arg0: i32, %arg1: memref<1xi32, #tpu.memory_space<smem>>) -> (i32, i32) {
    %c0_i32 = arith.constant 0 : i32
    %c0_i32_0 = arith.constant 0 : i32
    %c0_i32_1 = arith.constant 0 : i32
    return %c0_i32, %c0_i32_0 : i32, i32
  }
  func.func @transform_15(%arg0: i32, %arg1: memref<1xi32, #tpu.memory_space<smem>>) -> (i32, i32) {
    %c0_i32 = arith.constant 0 : i32
    %c0_i32_0 = arith.constant 0 : i32
    %c0_i32_1 = arith.constant 0 : i32
    return %c0_i32, %c0_i32_0 : i32, i32
  }
  func.func @transform_16(%arg0: i32, %arg1: memref<1xi32, #tpu.memory_space<smem>>) -> (i32, i32) {
    %c0_i32 = arith.constant 0 : i32
    %c0_i32_0 = arith.constant 0 : i32
    %c0_i32_1 = arith.constant 0 : i32
    return %c0_i32, %c0_i32_0 : i32, i32
  }
  func.func @transform_17(%arg0: i32, %arg1: memref<1xi32, #tpu.memory_space<smem>>) -> (i32, i32, i32) {
    %c0_i32 = arith.constant 0 : i32
    %c0_i32_0 = arith.constant 0 : i32
    %c0_i32_1 = arith.constant 0 : i32
    return %arg0, %c0_i32, %c0_i32_0 : i32, i32, i32
  }
  func.func @transform_18(%arg0: i32, %arg1: memref<1xi32, #tpu.memory_space<smem>>) -> (i32, i32, i32) {
    %c0_i32 = arith.constant 0 : i32
    %c0_i32_0 = arith.constant 0 : i32
    %c0_i32_1 = arith.constant 0 : i32
    return %arg0, %c0_i32, %c0_i32_0 : i32, i32, i32
  }
  func.func @transform_19(%arg0: i32, %arg1: memref<1xi32, #tpu.memory_space<smem>>) -> (i32, i32) {
    %c0_i32 = arith.constant 0 : i32
    %c0_i32_0 = arith.constant 0 : i32
    %c0_i32_1 = arith.constant 0 : i32
    return %c0_i32, %c0_i32_0 : i32, i32
  }
  func.func @transform_20(%arg0: i32, %arg1: memref<1xi32, #tpu.memory_space<smem>>) -> (i32, i32) {
    %c0_i32 = arith.constant 0 : i32
    %c0_i32_0 = arith.constant 0 : i32
    %c0_i32_1 = arith.constant 0 : i32
    return %c0_i32, %c0_i32_0 : i32, i32
  }
  func.func @transform_21(%arg0: i32, %arg1: memref<1xi32, #tpu.memory_space<smem>>) -> (i32, i32) {
    %c0_i32 = arith.constant 0 : i32
    %c0_i32_0 = arith.constant 0 : i32
    %c0_i32_1 = arith.constant 0 : i32
    return %c0_i32, %c0_i32_0 : i32, i32
  }
  func.func @transform_22(%arg0: i32, %arg1: memref<1xi32, #tpu.memory_space<smem>>) -> (i32, i32) {
    %c0_i32 = arith.constant 0 : i32
    %c0_i32_0 = arith.constant 0 : i32
    %c0_i32_1 = arith.constant 0 : i32
    return %c0_i32, %c0_i32_0 : i32, i32
  }
  func.func @transform_23(%arg0: i32, %arg1: memref<1xi32, #tpu.memory_space<smem>>) -> (i32, i32, i32) {
    %c0_i32 = arith.constant 0 : i32
    %c0_i32_0 = arith.constant 0 : i32
    %c0_i32_1 = arith.constant 0 : i32
    return %arg0, %c0_i32, %c0_i32_0 : i32, i32, i32
  }
  func.func @transform_24(%arg0: i32, %arg1: memref<1xi32, #tpu.memory_space<smem>>) -> (i32, i32, i32) {
    %c0_i32 = arith.constant 0 : i32
    %c0_i32_0 = arith.constant 0 : i32
    %c0_i32_1 = arith.constant 0 : i32
    return %arg0, %c0_i32, %c0_i32_0 : i32, i32, i32
  }
  func.func @transform_25(%arg0: i32, %arg1: memref<1xi32, #tpu.memory_space<smem>>) -> (i32, i32, i32) {
    %c0_i32 = arith.constant 0 : i32
    %c0_i32_0 = arith.constant 0 : i32
    %c0_i32_1 = arith.constant 0 : i32
    return %arg0, %c0_i32, %c0_i32_0 : i32, i32, i32
  }
}

</mosaic_0001>

<llo_original>
// kernel: _bnn_apply_jit.1
$region0: #{_bnn_apply_jit.1}
  #allocation0 [shape = 'u32[]', space=smem, size = 0x4, offset = 0x4, fixed_abs, tag = 'smem constant byte address 0x4 - core index']
  #allocation1 [shape = 'u32[72,128]{1,0:T(1,128)}', space=vmem, size = 0x9000, scoped, tag = 'internal scratch']
  #allocation2 [shape = 's32[1]{0}', space=sflag, size = 0x4, scoped, tag = 'scoped memory for _bnn_apply_jit.1']
  #allocation3 [shape = 's32[1]{0:T(128)S(6)}', space=smem, size = 0x200, scoped, tag = 'prefetched SMEM operand 0']
  %s0 = inlined_call_operand.<no memory space> [shape: s32[1], index: 0, kind: input, shape index: {}]
  %s1 = inlined_call_operand.vmem [shape: f32[8,32], index: 1, kind: input, shape index: {}]
  %s2 = inlined_call_operand.vmem [shape: f32[32,256], index: 2, kind: input, shape index: {}]
  %s3 = inlined_call_operand.vmem [shape: f32[32,256], index: 3, kind: input, shape index: {}]
  %s4 = inlined_call_operand.vmem [shape: f32[1,256], index: 4, kind: input, shape index: {}]
  %s5 = inlined_call_operand.vmem [shape: f32[1,256], index: 5, kind: input, shape index: {}]
  %s6 = inlined_call_operand.vmem [shape: f32[1,32,256], index: 6, kind: input, shape index: {}]
  %s7 = inlined_call_operand.vmem [shape: f32[1,1,256], index: 7, kind: input, shape index: {}]
  %s8 = inlined_call_operand.vmem [shape: f32[256,128], index: 8, kind: input, shape index: {}]
  %s9 = inlined_call_operand.vmem [shape: f32[256,128], index: 9, kind: input, shape index: {}]
  %s10 = inlined_call_operand.vmem [shape: f32[1,128], index: 10, kind: input, shape index: {}]
  %s11 = inlined_call_operand.vmem [shape: f32[1,128], index: 11, kind: input, shape index: {}]
  %s12 = inlined_call_operand.vmem [shape: f32[1,256,128], index: 12, kind: input, shape index: {}]
  %s13 = inlined_call_operand.vmem [shape: f32[1,1,128], index: 13, kind: input, shape index: {}]
  %s14 = inlined_call_operand.vmem [shape: f32[128,128], index: 14, kind: input, shape index: {}]
  %s15 = inlined_call_operand.vmem [shape: f32[128,128], index: 15, kind: input, shape index: {}]
  %s16 = inlined_call_operand.vmem [shape: f32[1,128], index: 16, kind: input, shape index: {}]
  %s17 = inlined_call_operand.vmem [shape: f32[1,128], index: 17, kind: input, shape index: {}]
  %s18 = inlined_call_operand.vmem [shape: f32[1,128,128], index: 18, kind: input, shape index: {}]
  %s19 = inlined_call_operand.vmem [shape: f32[1,1,128], index: 19, kind: input, shape index: {}]
  %s20 = inlined_call_operand.vmem [shape: f32[128,128], index: 20, kind: input, shape index: {}]
  %s21 = inlined_call_operand.vmem [shape: f32[128,128], index: 21, kind: input, shape index: {}]
  %s22 = inlined_call_operand.vmem [shape: f32[1,128], index: 22, kind: input, shape index: {}]
  %s23 = inlined_call_operand.vmem [shape: f32[1,128], index: 23, kind: input, shape index: {}]
  %s24 = inlined_call_operand.vmem [shape: f32[1,128,128], index: 24, kind: input, shape index: {}]
  %s25 = inlined_call_operand.vmem [shape: f32[1,1,128], index: 25, kind: input, shape index: {}]
  %s26 = inlined_call_operand.vmem [shape: f32[1,8,128], index: 26, kind: output, shape index: {}]
  %s27 = sld [smem:[#allocation0]]
  $region110: #{_bnn_apply_jit.1} parent=0
    _
  %s29 = ssub.s32 1, %s27
  %s30 = scalar_select 0, %s29, %s27
  %31 = sst [smem:[#allocation3]] %s0
  // Predicated region
  $region2: #{_bnn_apply_jit.1} parent=0 // pred_check
    _
  $region3: #{_bnn_apply_jit.1} parent=0 // pred_check_branch
    %33 = sbr.rel (0) target = $region5
  $region4: #{_bnn_apply_jit.1} parent=0 // pred_region
    _
  $region5: #{_bnn_apply_jit.1} parent=0 // pred_fallthru
    _
  // Predicated region
  $region6: #{_bnn_apply_jit.1} parent=0 // pred_check
    _
  $region7: #{_bnn_apply_jit.1} parent=0 // pred_check_branch
    %35 = sbr.rel (0) target = $region9
  $region8: #{_bnn_apply_jit.1} parent=0 // pred_region
    _
  $region9: #{_bnn_apply_jit.1} parent=0 // pred_fallthru
    _
  // Predicated region
  $region10: #{_bnn_apply_jit.1} parent=0 // pred_check
    _
  $region11: #{_bnn_apply_jit.1} parent=0 // pred_check_branch
    %37 = sbr.rel (0) target = $region13
  $region12: #{_bnn_apply_jit.1} parent=0 // pred_region
    _
  $region13: #{_bnn_apply_jit.1} parent=0 // pred_fallthru
    _
  // Predicated region
  $region14: #{_bnn_apply_jit.1} parent=0 // pred_check
    _
  $region15: #{_bnn_apply_jit.1} parent=0 // pred_check_branch
    %39 = sbr.rel (0) target = $region17
  $region16: #{_bnn_apply_jit.1} parent=0 // pred_region
    _
  $region17: #{_bnn_apply_jit.1} parent=0 // pred_fallthru
    _
  // Predicated region
  $region18: #{_bnn_apply_jit.1} parent=0 // pred_check
    _
  $region19: #{_bnn_apply_jit.1} parent=0 // pred_check_branch
    %41 = sbr.rel (0) target = $region21
  $region20: #{_bnn_apply_jit.1} parent=0 // pred_region
    _
  $region21: #{_bnn_apply_jit.1} parent=0 // pred_fallthru
    _
  // Predicated region
  $region22: #{_bnn_apply_jit.1} parent=0 // pred_check
    _
  $region23: #{_bnn_apply_jit.1} parent=0 // pred_check_branch
    %43 = sbr.rel (0) target = $region25
  $region24: #{_bnn_apply_jit.1} parent=0 // pred_region
    _
  $region25: #{_bnn_apply_jit.1} parent=0 // pred_fallthru
    _
  // Predicated region
  $region26: #{_bnn_apply_jit.1} parent=0 // pred_check
    _
  $region27: #{_bnn_apply_jit.1} parent=0 // pred_check_branch
    %45 = sbr.rel (0) target = $region29
  $region28: #{_bnn_apply_jit.1} parent=0 // pred_region
    _
  $region29: #{_bnn_apply_jit.1} parent=0 // pred_fallthru
    _
  // Predicated region
  $region30: #{_bnn_apply_jit.1} parent=0 // pred_check
    _
  $region31: #{_bnn_apply_jit.1} parent=0 // pred_check_branch
    %47 = sbr.rel (0) target = $region33
  $region32: #{_bnn_apply_jit.1} parent=0 // pred_region
    _
  $region33: #{_bnn_apply_jit.1} parent=0 // pred_fallthru
    _
  // Predicated region
  $region34: #{_bnn_apply_jit.1} parent=0 // pred_check
    _
  $region35: #{_bnn_apply_jit.1} parent=0 // pred_check_branch
    %49 = sbr.rel (0) target = $region37
  $region36: #{_bnn_apply_jit.1} parent=0 // pred_region
    _
  $region37: #{_bnn_apply_jit.1} parent=0 // pred_fallthru
    _
  // Predicated region
  $region38: #{_bnn_apply_jit.1} parent=0 // pred_check
    _
  $region39: #{_bnn_apply_jit.1} parent=0 // pred_check_branch
    %51 = sbr.rel (0) target = $region41
  $region40: #{_bnn_apply_jit.1} parent=0 // pred_region
    _
  $region41: #{_bnn_apply_jit.1} parent=0 // pred_fallthru
    _
  // Predicated region
  $region42: #{_bnn_apply_jit.1} parent=0 // pred_check
    _
  $region43: #{_bnn_apply_jit.1} parent=0 // pred_check_branch
    %53 = sbr.rel (0) target = $region45
  $region44: #{_bnn_apply_jit.1} parent=0 // pred_region
    _
  $region45: #{_bnn_apply_jit.1} parent=0 // pred_fallthru
    _
  // Predicated region
  $region46: #{_bnn_apply_jit.1} parent=0 // pred_check
    _
  $region47: #{_bnn_apply_jit.1} parent=0 // pred_check_branch
    %55 = sbr.rel (0) target = $region49
  $region48: #{_bnn_apply_jit.1} parent=0 // pred_region
    _
  $region49: #{_bnn_apply_jit.1} parent=0 // pred_fallthru
    _
  // Predicated region
  $region50: #{_bnn_apply_jit.1} parent=0 // pred_check
    _
  $region51: #{_bnn_apply_jit.1} parent=0 // pred_check_branch
    %57 = sbr.rel (0) target = $region53
  $region52: #{_bnn_apply_jit.1} parent=0 // pred_region
    _
  $region53: #{_bnn_apply_jit.1} parent=0 // pred_fallthru
    _
  // Predicated region
  $region54: #{_bnn_apply_jit.1} parent=0 // pred_check
    _
  $region55: #{_bnn_apply_jit.1} parent=0 // pred_check_branch
    %59 = sbr.rel (0) target = $region57
  $region56: #{_bnn_apply_jit.1} parent=0 // pred_region
    _
  $region57: #{_bnn_apply_jit.1} parent=0 // pred_fallthru
    _
  // Predicated region
  $region58: #{_bnn_apply_jit.1} parent=0 // pred_check
    _
  $region59: #{_bnn_apply_jit.1} parent=0 // pred_check_branch
    %61 = sbr.rel (0) target = $region61
  $region60: #{_bnn_apply_jit.1} parent=0 // pred_region
    _
  $region61: #{_bnn_apply_jit.1} parent=0 // pred_fallthru
    _
  // Predicated region
  $region62: #{_bnn_apply_jit.1} parent=0 // pred_check
    _
  $region63: #{_bnn_apply_jit.1} parent=0 // pred_check_branch
    %63 = sbr.rel (0) target = $region65
  $region64: #{_bnn_apply_jit.1} parent=0 // pred_region
    _
  $region65: #{_bnn_apply_jit.1} parent=0 // pred_fallthru
    _
  // Predicated region
  $region66: #{_bnn_apply_jit.1} parent=0 // pred_check
    _
  $region67: #{_bnn_apply_jit.1} parent=0 // pred_check_branch
    %65 = sbr.rel (0) target = $region69
  $region68: #{_bnn_apply_jit.1} parent=0 // pred_region
    _
  $region69: #{_bnn_apply_jit.1} parent=0 // pred_fallthru
    _
  // Predicated region
  $region70: #{_bnn_apply_jit.1} parent=0 // pred_check
    _
  $region71: #{_bnn_apply_jit.1} parent=0 // pred_check_branch
    %67 = sbr.rel (0) target = $region73
  $region72: #{_bnn_apply_jit.1} parent=0 // pred_region
    _
  $region73: #{_bnn_apply_jit.1} parent=0 // pred_fallthru
    _
  // Predicated region
  $region74: #{_bnn_apply_jit.1} parent=0 // pred_check
    _
  $region75: #{_bnn_apply_jit.1} parent=0 // pred_check_branch
    %69 = sbr.rel (0) target = $region77
  $region76: #{_bnn_apply_jit.1} parent=0 // pred_region
    _
  $region77: #{_bnn_apply_jit.1} parent=0 // pred_fallthru
    _
  // Predicated region
  $region78: #{_bnn_apply_jit.1} parent=0 // pred_check
    _
  $region79: #{_bnn_apply_jit.1} parent=0 // pred_check_branch
    %71 = sbr.rel (0) target = $region81
  $region80: #{_bnn_apply_jit.1} parent=0 // pred_region
    _
  $region81: #{_bnn_apply_jit.1} parent=0 // pred_fallthru
    _
  // Predicated region
  $region82: #{_bnn_apply_jit.1} parent=0 // pred_check
    _
  $region83: #{_bnn_apply_jit.1} parent=0 // pred_check_branch
    %73 = sbr.rel (0) target = $region85
  $region84: #{_bnn_apply_jit.1} parent=0 // pred_region
    _
  $region85: #{_bnn_apply_jit.1} parent=0 // pred_fallthru
    _
  // Predicated region
  $region86: #{_bnn_apply_jit.1} parent=0 // pred_check
    _
  $region87: #{_bnn_apply_jit.1} parent=0 // pred_check_branch
    %75 = sbr.rel (0) target = $region89
  $region88: #{_bnn_apply_jit.1} parent=0 // pred_region
    _
  $region89: #{_bnn_apply_jit.1} parent=0 // pred_fallthru
    _
  // Predicated region
  $region90: #{_bnn_apply_jit.1} parent=0 // pred_check
    _
  $region91: #{_bnn_apply_jit.1} parent=0 // pred_check_branch
    %77 = sbr.rel (0) target = $region93
  $region92: #{_bnn_apply_jit.1} parent=0 // pred_region
    _
  $region93: #{_bnn_apply_jit.1} parent=0 // pred_fallthru
    _
  // Predicated region
  $region94: #{_bnn_apply_jit.1} parent=0 // pred_check
    _
  $region95: #{_bnn_apply_jit.1} parent=0 // pred_check_branch
    %79 = sbr.rel (0) target = $region97
  $region96: #{_bnn_apply_jit.1} parent=0 // pred_region
    _
  $region97: #{_bnn_apply_jit.1} parent=0 // pred_fallthru
    _
  // Predicated region
  $region98: #{_bnn_apply_jit.1} parent=0 // pred_check
    _
  $region99: #{_bnn_apply_jit.1} parent=0 // pred_check_branch
    %81 = sbr.rel (0) target = $region101
  $region100: #{_bnn_apply_jit.1} parent=0 // pred_region
    _
  $region101: #{_bnn_apply_jit.1} parent=0 // pred_fallthru
    _
  %v82 = vld [vmem:[%s1] sm:$0xff]
  %v83 = vld [vmem:[%s2] sm:$0xff]
  %v84 = vld [vmem:[%s2 + $0x8] sm:$0xff]
  %v85 = vld [vmem:[%s2 + $0x10] sm:$0xff]
  %v86 = vld [vmem:[%s2 + $0x18] sm:$0xff]
  %v87 = vld [vmem:[%s2 + $0x20] sm:$0xff]
  %v88 = vld [vmem:[%s2 + $0x28] sm:$0xff]
  %v89 = vld [vmem:[%s2 + $0x30] sm:$0xff]
  %v90 = vld [vmem:[%s2 + $0x38] sm:$0xff]
  %v91 = vld [vmem:[%s3] sm:$0xff]
  %v92 = vld [vmem:[%s3 + $0x8] sm:$0xff]
  %v93 = vld [vmem:[%s3 + $0x10] sm:$0xff]
  %v94 = vld [vmem:[%s3 + $0x18] sm:$0xff]
  %v95 = vld [vmem:[%s3 + $0x20] sm:$0xff]
  %v96 = vld [vmem:[%s3 + $0x28] sm:$0xff]
  %v97 = vld [vmem:[%s3 + $0x30] sm:$0xff]
  %v98 = vld [vmem:[%s3 + $0x38] sm:$0xff]
  %v99 = vld [vmem:[%s4] sm:$0x3]
  %v100 = vld [vmem:[%s5] sm:$0x3]
  %v101 = vld [vmem:[%s6] sm:$0xff]
  %v102 = vld [vmem:[%s6 + $0x8] sm:$0xff]
  %v103 = vld [vmem:[%s6 + $0x10] sm:$0xff]
  %v104 = vld [vmem:[%s6 + $0x18] sm:$0xff]
  %v105 = vld [vmem:[%s6 + $0x20] sm:$0xff]
  %v106 = vld [vmem:[%s6 + $0x28] sm:$0xff]
  %v107 = vld [vmem:[%s6 + $0x30] sm:$0xff]
  %v108 = vld [vmem:[%s6 + $0x38] sm:$0xff]
  %v109 = vld [vmem:[%s7] sm:$0x3]
  %v110 = vmul.f32 %v91, %v101
  %v111 = vmul.f32 %v92, %v102
  %v112 = vmul.f32 %v93, %v103
  %v113 = vmul.f32 %v94, %v104
  %v114 = vmul.f32 %v95, %v105
  %v115 = vmul.f32 %v96, %v106
  %v116 = vmul.f32 %v97, %v107
  %v117 = vmul.f32 %v98, %v108
  %v118 = vadd.f32 %v83, %v110
  %v119 = vadd.f32 %v84, %v111
  %v120 = vadd.f32 %v85, %v112
  %v121 = vadd.f32 %v86, %v113
  %v122 = vadd.f32 %v87, %v114
  %v123 = vadd.f32 %v88, %v115
  %v124 = vadd.f32 %v89, %v116
  %v125 = vadd.f32 %v90, %v117
  %v126 = vmul.f32 %v100, %v109
  %v127 = vadd.f32 %v99, %v126
  %v129 = vperm.slane %v127, 0
  %v130 = vperm.slane %v127, 1
  %vm133 = vcmask 261120
  %v135 = vsel %vm133, %v82, 0
  %137 = vmatpush.msra.mxu0 0.0
  %138 = vmatpush.msra.mxu0 0.0
  %139 = vmatpush.msra.mxu0 0.0
  %140 = vmatpush.msra.mxu0 0.0
  %141 = vmatpush.msra.mxu0 0.0
  %142 = vmatpush.msra.mxu0 0.0
  %143 = vmatpush.msra.mxu0 0.0
  %144 = vmatpush.msra.mxu0 0.0
  %145 = vmatpush.msra.mxu0 0.0
  %146 = vmatpush.msra.mxu0 0.0
  %147 = vmatpush.msra.mxu0 0.0
  %148 = vmatpush.msra.mxu0 0.0
  %149 = vmatpush.msra.mxu0 %v124
  %150 = vmatpush.msra.mxu0 %v122
  %151 = vmatpush.msra.mxu0 %v120
  %152 = vmatpush.msra.mxu0 %v118
  %153 = vmatmul.f32.gmra.mxu0 %v135
  %v154 = vpop.f32.mrf.mxu0
  %v155 = vadd.f32 %v129, %v154
  %156 = vdwg.mxu0
  %157 = vmatpush.msra.mxu0 0.0
  %158 = vmatpush.msra.mxu0 0.0
  %159 = vmatpush.msra.mxu0 0.0
  %160 = vmatpush.msra.mxu0 0.0
  %161 = vmatpush.msra.mxu0 0.0
  %162 = vmatpush.msra.mxu0 0.0
  %163 = vmatpush.msra.mxu0 0.0
  %164 = vmatpush.msra.mxu0 0.0
  %165 = vmatpush.msra.mxu0 0.0
  %166 = vmatpush.msra.mxu0 0.0
  %167 = vmatpush.msra.mxu0 0.0
  %168 = vmatpush.msra.mxu0 0.0
  %169 = vmatpush.msra.mxu0 %v125
  %170 = vmatpush.msra.mxu0 %v123
  %171 = vmatpush.msra.mxu0 %v121
  %172 = vmatpush.msra.mxu0 %v119
  %173 = vmatmul.f32.gmra.mxu0 %v135
  %v174 = vpop.f32.mrf.mxu0
  %v175 = vadd.f32 %v130, %v174
  %176 = vdwg.mxu0
  %v177 = vmax.f32 %v155, 0.0
  %v178 = vmax.f32 %v175, 0.0
  %v179 = vld [vmem:[%s8] sm:$0xff]
  %v180 = vld [vmem:[%s8 + $0x8] sm:$0xff]
  %v181 = vld [vmem:[%s8 + $0x10] sm:$0xff]
  %v182 = vld [vmem:[%s8 + $0x18] sm:$0xff]
  %v183 = vld [vmem:[%s8 + $0x20] sm:$0xff]
  %v184 = vld [vmem:[%s8 + $0x28] sm:$0xff]
  %v185 = vld [vmem:[%s8 + $0x30] sm:$0xff]
  %v186 = vld [vmem:[%s8 + $0x38] sm:$0xff]
  %v187 = vld [vmem:[%s8 + $0x40] sm:$0xff]
  %v188 = vld [vmem:[%s8 + $0x48] sm:$0xff]
  %v189 = vld [vmem:[%s8 + $0x50] sm:$0xff]
  %v190 = vld [vmem:[%s8 + $0x58] sm:$0xff]
  %v191 = vld [vmem:[%s8 + $0x60] sm:$0xff]
  %v192 = vld [vmem:[%s8 + $0x68] sm:$0xff]
  %v193 = vld [vmem:[%s8 + $0x70] sm:$0xff]
  %v194 = vld [vmem:[%s8 + $0x78] sm:$0xff]
  %v195 = vld [vmem:[%s8 + $0x80] sm:$0xff]
  %v196 = vld [vmem:[%s8 + $0x88] sm:$0xff]
  %v197 = vld [vmem:[%s8 + $0x90] sm:$0xff]
  %v198 = vld [vmem:[%s8 + $0x98] sm:$0xff]
  %v199 = vld [vmem:[%s8 + $0xa0] sm:$0xff]
  %v200 = vld [vmem:[%s8 + $0xa8] sm:$0xff]
  %v201 = vld [vmem:[%s8 + $0xb0] sm:$0xff]
  %v202 = vld [vmem:[%s8 + $0xb8] sm:$0xff]
  %v203 = vld [vmem:[%s8 + $0xc0] sm:$0xff]
  %v204 = vld [vmem:[%s8 + $0xc8] sm:$0xff]
  %v205 = vld [vmem:[%s8 + $0xd0] sm:$0xff]
  %v206 = vld [vmem:[%s8 + $0xd8] sm:$0xff]
  %v207 = vld [vmem:[%s8 + $0xe0] sm:$0xff]
  %v208 = vld [vmem:[%s8 + $0xe8] sm:$0xff]
  %v209 = vld [vmem:[%s8 + $0xf0] sm:$0xff]
  %v210 = vld [vmem:[%s8 + $0xf8] sm:$0xff]
  %v211 = vld [vmem:[%s9] sm:$0xff]
  %v212 = vld [vmem:[%s9 + $0x8] sm:$0xff]
  %v213 = vld [vmem:[%s9 + $0x10] sm:$0xff]
  %v214 = vld [vmem:[%s9 + $0x18] sm:$0xff]
  %v215 = vld [vmem:[%s9 + $0x20] sm:$0xff]
  %v216 = vld [vmem:[%s9 + $0x28] sm:$0xff]
  %v217 = vld [vmem:[%s9 + $0x30] sm:$0xff]
  %v218 = vld [vmem:[%s9 + $0x38] sm:$0xff]
  %v219 = vld [vmem:[%s9 + $0x40] sm:$0xff]
  %v220 = vld [vmem:[%s9 + $0x48] sm:$0xff]
  %v221 = vld [vmem:[%s9 + $0x50] sm:$0xff]
  %v222 = vld [vmem:[%s9 + $0x58] sm:$0xff]
  %v223 = vld [vmem:[%s9 + $0x60] sm:$0xff]
  %v224 = vld [vmem:[%s9 + $0x68] sm:$0xff]
  %v225 = vld [vmem:[%s9 + $0x70] sm:$0xff]
  %v226 = vld [vmem:[%s9 + $0x78] sm:$0xff]
  %v227 = vld [vmem:[%s9 + $0x80] sm:$0xff]
  %v228 = vld [vmem:[%s9 + $0x88] sm:$0xff]
  %v229 = vld [vmem:[%s9 + $0x90] sm:$0xff]
  %v230 = vld [vmem:[%s9 + $0x98] sm:$0xff]
  %v231 = vld [vmem:[%s9 + $0xa0] sm:$0xff]
  %v232 = vld [vmem:[%s9 + $0xa8] sm:$0xff]
  %v233 = vld [vmem:[%s9 + $0xb0] sm:$0xff]
  %v234 = vld [vmem:[%s9 + $0xb8] sm:$0xff]
  %v235 = vld [vmem:[%s9 + $0xc0] sm:$0xff]
  %v236 = vld [vmem:[%s9 + $0xc8] sm:$0xff]
  %v237 = vld [vmem:[%s9 + $0xd0] sm:$0xff]
  %v238 = vld [vmem:[%s9 + $0xd8] sm:$0xff]
  %v239 = vld [vmem:[%s9 + $0xe0] sm:$0xff]
  %v240 = vld [vmem:[%s9 + $0xe8] sm:$0xff]
  %v241 = vld [vmem:[%s9 + $0xf0] sm:$0xff]
  %v242 = vld [vmem:[%s9 + $0xf8] sm:$0xff]
  %v243 = vld [vmem:[%s10] sm:$0x1]
  %v244 = vld [vmem:[%s11] sm:$0x1]
  %v245 = vld [vmem:[%s12] sm:$0xff]
  %v246 = vld [vmem:[%s12 + $0x8] sm:$0xff]
  %v247 = vld [vmem:[%s12 + $0x10] sm:$0xff]
  %v248 = vld [vmem:[%s12 + $0x18] sm:$0xff]
  %v249 = vld [vmem:[%s12 + $0x20] sm:$0xff]
  %v250 = vld [vmem:[%s12 + $0x28] sm:$0xff]
  %v251 = vld [vmem:[%s12 + $0x30] sm:$0xff]
  %v252 = vld [vmem:[%s12 + $0x38] sm:$0xff]
  %v253 = vld [vmem:[%s12 + $0x40] sm:$0xff]
  %v254 = vld [vmem:[%s12 + $0x48] sm:$0xff]
  %v255 = vld [vmem:[%s12 + $0x50] sm:$0xff]
  %v256 = vld [vmem:[%s12 + $0x58] sm:$0xff]
  %v257 = vld [vmem:[%s12 + $0x60] sm:$0xff]
  %v258 = vld [vmem:[%s12 + $0x68] sm:$0xff]
  %v259 = vld [vmem:[%s12 + $0x70] sm:$0xff]
  %v260 = vld [vmem:[%s12 + $0x78] sm:$0xff]
  %v261 = vld [vmem:[%s12 + $0x80] sm:$0xff]
  %v262 = vld [vmem:[%s12 + $0x88] sm:$0xff]
  %v263 = vld [vmem:[%s12 + $0x90] sm:$0xff]
  %v264 = vld [vmem:[%s12 + $0x98] sm:$0xff]
  %v265 = vld [vmem:[%s12 + $0xa0] sm:$0xff]
  %v266 = vld [vmem:[%s12 + $0xa8] sm:$0xff]
  %v267 = vld [vmem:[%s12 + $0xb0] sm:$0xff]
  %v268 = vld [vmem:[%s12 + $0xb8] sm:$0xff]
  %v269 = vld [vmem:[%s12 + $0xc0] sm:$0xff]
  %v270 = vld [vmem:[%s12 + $0xc8] sm:$0xff]
  %v271 = vld [vmem:[%s12 + $0xd0] sm:$0xff]
  %v272 = vld [vmem:[%s12 + $0xd8] sm:$0xff]
  %v273 = vld [vmem:[%s12 + $0xe0] sm:$0xff]
  %v274 = vld [vmem:[%s12 + $0xe8] sm:$0xff]
  %v275 = vld [vmem:[%s12 + $0xf0] sm:$0xff]
  %v276 = vld [vmem:[%s12 + $0xf8] sm:$0xff]
  %v277 = vld [vmem:[%s13] sm:$0x1]
  %v278 = vmul.f32 %v211, %v245
  %v279 = vmul.f32 %v212, %v246
  %v280 = vmul.f32 %v213, %v247
  %v281 = vmul.f32 %v214, %v248
  %v282 = vmul.f32 %v215, %v249
  %v283 = vmul.f32 %v216, %v250
  %v284 = vmul.f32 %v217, %v251
  %v285 = vmul.f32 %v218, %v252
  %v286 = vmul.f32 %v219, %v253
  %v287 = vmul.f32 %v220, %v254
  %v288 = vmul.f32 %v221, %v255
  %v289 = vmul.f32 %v222, %v256
  %v290 = vmul.f32 %v223, %v257
  %v291 = vmul.f32 %v224, %v258
  %v292 = vmul.f32 %v225, %v259
  %v293 = vmul.f32 %v226, %v260
  %v294 = vmul.f32 %v227, %v261
  %v295 = vmul.f32 %v228, %v262
  %v296 = vmul.f32 %v229, %v263
  %v297 = vmul.f32 %v230, %v264
  %v298 = vmul.f32 %v231, %v265
  %v299 = vmul.f32 %v232, %v266
  %v300 = vmul.f32 %v233, %v267
  %v301 = vmul.f32 %v234, %v268
  %v302 = vmul.f32 %v235, %v269
  %v303 = vmul.f32 %v236, %v270
  %v304 = vmul.f32 %v237, %v271
  %v305 = vmul.f32 %v238, %v272
  %v306 = vmul.f32 %v239, %v273
  %v307 = vmul.f32 %v240, %v274
  %v308 = vmul.f32 %v241, %v275
  %v309 = vmul.f32 %v242, %v276
  %v310 = vadd.f32 %v179, %v278
  %v311 = vadd.f32 %v180, %v279
  %v312 = vadd.f32 %v181, %v280
  %v313 = vadd.f32 %v182, %v281
  %v314 = vadd.f32 %v183, %v282
  %v315 = vadd.f32 %v184, %v283
  %v316 = vadd.f32 %v185, %v284
  %v317 = vadd.f32 %v186, %v285
  %v318 = vadd.f32 %v187, %v286
  %v319 = vadd.f32 %v188, %v287
  %v320 = vadd.f32 %v189, %v288
  %v321 = vadd.f32 %v190, %v289
  %v322 = vadd.f32 %v191, %v290
  %v323 = vadd.f32 %v192, %v291
  %v324 = vadd.f32 %v193, %v292
  %v325 = vadd.f32 %v194, %v293
  %v326 = vadd.f32 %v195, %v294
  %v327 = vadd.f32 %v196, %v295
  %v328 = vadd.f32 %v197, %v296
  %v329 = vadd.f32 %v198, %v297
  %v330 = vadd.f32 %v199, %v298
  %v331 = vadd.f32 %v200, %v299
  %v332 = vadd.f32 %v201, %v300
  %v333 = vadd.f32 %v202, %v301
  %v334 = vadd.f32 %v203, %v302
  %v335 = vadd.f32 %v204, %v303
  %v336 = vadd.f32 %v205, %v304
  %v337 = vadd.f32 %v206, %v305
  %v338 = vadd.f32 %v207, %v306
  %v339 = vadd.f32 %v208, %v307
  %v340 = vadd.f32 %v209, %v308
  %v341 = vadd.f32 %v210, %v309
  %v342 = vmul.f32 %v244, %v277
  %v343 = vadd.f32 %v243, %v342
  %v345 = vperm.slane %v343, 0
  %347 = vmatpush.msra.mxu0 %v325
  %348 = vmatpush.msra.mxu0 %v324
  %349 = vmatpush.msra.mxu0 %v323
  %350 = vmatpush.msra.mxu0 %v322
  %351 = vmatpush.msra.mxu0 %v321
  %352 = vmatpush.msra.mxu0 %v320
  %353 = vmatpush.msra.mxu0 %v319
  %354 = vmatpush.msra.mxu0 %v318
  %355 = vmatpush.msra.mxu0 %v317
  %356 = vmatpush.msra.mxu0 %v316
  %357 = vmatpush.msra.mxu0 %v315
  %358 = vmatpush.msra.mxu0 %v314
  %359 = vmatpush.msra.mxu0 %v313
  %360 = vmatpush.msra.mxu0 %v312
  %361 = vmatpush.msra.mxu0 %v311
  %362 = vmatpush.msra.mxu0 %v310
  %363 = vmatmul.f32.gmra.mxu0 %v177
  %v364 = vpop.f32.mrf.mxu0
  %v365 = vadd.f32 %v345, %v364
  %366 = vdwg.mxu0
  %367 = vmatpush.msra.mxu0 %v341
  %368 = vmatpush.msra.mxu0 %v340
  %369 = vmatpush.msra.mxu0 %v339
  %370 = vmatpush.msra.mxu0 %v338
  %371 = vmatpush.msra.mxu0 %v337
  %372 = vmatpush.msra.mxu0 %v336
  %373 = vmatpush.msra.mxu0 %v335
  %374 = vmatpush.msra.mxu0 %v334
  %375 = vmatpush.msra.mxu0 %v333
  %376 = vmatpush.msra.mxu0 %v332
  %377 = vmatpush.msra.mxu0 %v331
  %378 = vmatpush.msra.mxu0 %v330
  %379 = vmatpush.msra.mxu0 %v329
  %380 = vmatpush.msra.mxu0 %v328
  %381 = vmatpush.msra.mxu0 %v327
  %382 = vmatpush.msra.mxu0 %v326
  %383 = vmatmul.f32.gmra.mxu0 %v178
  %v384 = vpop.f32.mrf.mxu0
  %v385 = vadd.f32 %v365, %v384
  %386 = vdwg.mxu0
  %v387 = vmax.f32 %v385, 0.0
  %v388 = vld [vmem:[%s14] sm:$0xff]
  %v389 = vld [vmem:[%s14 + $0x8] sm:$0xff]
  %v390 = vld [vmem:[%s14 + $0x10] sm:$0xff]
  %v391 = vld [vmem:[%s14 + $0x18] sm:$0xff]
  %v392 = vld [vmem:[%s14 + $0x20] sm:$0xff]
  %v393 = vld [vmem:[%s14 + $0x28] sm:$0xff]
  %v394 = vld [vmem:[%s14 + $0x30] sm:$0xff]
  %v395 = vld [vmem:[%s14 + $0x38] sm:$0xff]
  %v396 = vld [vmem:[%s14 + $0x40] sm:$0xff]
  %v397 = vld [vmem:[%s14 + $0x48] sm:$0xff]
  %v398 = vld [vmem:[%s14 + $0x50] sm:$0xff]
  %v399 = vld [vmem:[%s14 + $0x58] sm:$0xff]
  %v400 = vld [vmem:[%s14 + $0x60] sm:$0xff]
  %v401 = vld [vmem:[%s14 + $0x68] sm:$0xff]
  %v402 = vld [vmem:[%s14 + $0x70] sm:$0xff]
  %v403 = vld [vmem:[%s14 + $0x78] sm:$0xff]
  %v404 = vld [vmem:[%s15] sm:$0xff]
  %v405 = vld [vmem:[%s15 + $0x8] sm:$0xff]
  %v406 = vld [vmem:[%s15 + $0x10] sm:$0xff]
  %v407 = vld [vmem:[%s15 + $0x18] sm:$0xff]
  %v408 = vld [vmem:[%s15 + $0x20] sm:$0xff]
  %v409 = vld [vmem:[%s15 + $0x28] sm:$0xff]
  %v410 = vld [vmem:[%s15 + $0x30] sm:$0xff]
  %v411 = vld [vmem:[%s15 + $0x38] sm:$0xff]
  %v412 = vld [vmem:[%s15 + $0x40] sm:$0xff]
  %v413 = vld [vmem:[%s15 + $0x48] sm:$0xff]
  %v414 = vld [vmem:[%s15 + $0x50] sm:$0xff]
  %v415 = vld [vmem:[%s15 + $0x58] sm:$0xff]
  %v416 = vld [vmem:[%s15 + $0x60] sm:$0xff]
  %v417 = vld [vmem:[%s15 + $0x68] sm:$0xff]
  %v418 = vld [vmem:[%s15 + $0x70] sm:$0xff]
  %v419 = vld [vmem:[%s15 + $0x78] sm:$0xff]
  %v420 = vld [vmem:[%s16] sm:$0x1]
  %v421 = vld [vmem:[%s17] sm:$0x1]
  %v422 = vld [vmem:[%s18] sm:$0xff]
  %v423 = vld [vmem:[%s18 + $0x8] sm:$0xff]
  %v424 = vld [vmem:[%s18 + $0x10] sm:$0xff]
  %v425 = vld [vmem:[%s18 + $0x18] sm:$0xff]
  %v426 = vld [vmem:[%s18 + $0x20] sm:$0xff]
  %v427 = vld [vmem:[%s18 + $0x28] sm:$0xff]
  %v428 = vld [vmem:[%s18 + $0x30] sm:$0xff]
  %v429 = vld [vmem:[%s18 + $0x38] sm:$0xff]
  %v430 = vld [vmem:[%s18 + $0x40] sm:$0xff]
  %v431 = vld [vmem:[%s18 + $0x48] sm:$0xff]
  %v432 = vld [vmem:[%s18 + $0x50] sm:$0xff]
  %v433 = vld [vmem:[%s18 + $0x58] sm:$0xff]
  %v434 = vld [vmem:[%s18 + $0x60] sm:$0xff]
  %v435 = vld [vmem:[%s18 + $0x68] sm:$0xff]
  %v436 = vld [vmem:[%s18 + $0x70] sm:$0xff]
  %v437 = vld [vmem:[%s18 + $0x78] sm:$0xff]
  %v438 = vld [vmem:[%s19] sm:$0x1]
  %v439 = vmul.f32 %v404, %v422
  %v440 = vmul.f32 %v405, %v423
  %v441 = vmul.f32 %v406, %v424
  %v442 = vmul.f32 %v407, %v425
  %v443 = vmul.f32 %v408, %v426
  %v444 = vmul.f32 %v409, %v427
  %v445 = vmul.f32 %v410, %v428
  %v446 = vmul.f32 %v411, %v429
  %v447 = vmul.f32 %v412, %v430
  %v448 = vmul.f32 %v413, %v431
  %v449 = vmul.f32 %v414, %v432
  %v450 = vmul.f32 %v415, %v433
  %v451 = vmul.f32 %v416, %v434
  %v452 = vmul.f32 %v417, %v435
  %v453 = vmul.f32 %v418, %v436
  %v454 = vmul.f32 %v419, %v437
  %v455 = vadd.f32 %v388, %v439
  %v456 = vadd.f32 %v389, %v440
  %v457 = vadd.f32 %v390, %v441
  %v458 = vadd.f32 %v391, %v442
  %v459 = vadd.f32 %v392, %v443
  %v460 = vadd.f32 %v393, %v444
  %v461 = vadd.f32 %v394, %v445
  %v462 = vadd.f32 %v395, %v446
  %v463 = vadd.f32 %v396, %v447
  %v464 = vadd.f32 %v397, %v448
  %v465 = vadd.f32 %v398, %v449
  %v466 = vadd.f32 %v399, %v450
  %v467 = vadd.f32 %v400, %v451
  %v468 = vadd.f32 %v401, %v452
  %v469 = vadd.f32 %v402, %v453
  %v470 = vadd.f32 %v403, %v454
  %v471 = vmul.f32 %v421, %v438
  %v472 = vadd.f32 %v420, %v471
  %v474 = vperm.slane %v472, 0
  %476 = vmatpush.msra.mxu0 %v470
  %477 = vmatpush.msra.mxu0 %v469
  %478 = vmatpush.msra.mxu0 %v468
  %479 = vmatpush.msra.mxu0 %v467
  %480 = vmatpush.msra.mxu0 %v466
  %481 = vmatpush.msra.mxu0 %v465
  %482 = vmatpush.msra.mxu0 %v464
  %483 = vmatpush.msra.mxu0 %v463
  %484 = vmatpush.msra.mxu0 %v462
  %485 = vmatpush.msra.mxu0 %v461
  %486 = vmatpush.msra.mxu0 %v460
  %487 = vmatpush.msra.mxu0 %v459
  %488 = vmatpush.msra.mxu0 %v458
  %489 = vmatpush.msra.mxu0 %v457
  %490 = vmatpush.msra.mxu0 %v456
  %491 = vmatpush.msra.mxu0 %v455
  %492 = vmatmul.f32.gmra.mxu0 %v387
  %v493 = vpop.f32.mrf.mxu0
  %v494 = vadd.f32 %v474, %v493
  %495 = vdwg.mxu0
  %v496 = vmax.f32 %v494, 0.0
  %v497 = vld [vmem:[%s20] sm:$0xff]
  %v498 = vld [vmem:[%s20 + $0x8] sm:$0xff]
  %v499 = vld [vmem:[%s20 + $0x10] sm:$0xff]
  %v500 = vld [vmem:[%s20 + $0x18] sm:$0xff]
  %v501 = vld [vmem:[%s20 + $0x20] sm:$0xff]
  %v502 = vld [vmem:[%s20 + $0x28] sm:$0xff]
  %v503 = vld [vmem:[%s20 + $0x30] sm:$0xff]
  %v504 = vld [vmem:[%s20 + $0x38] sm:$0xff]
  %v505 = vld [vmem:[%s20 + $0x40] sm:$0xff]
  %v506 = vld [vmem:[%s20 + $0x48] sm:$0xff]
  %v507 = vld [vmem:[%s20 + $0x50] sm:$0xff]
  %v508 = vld [vmem:[%s20 + $0x58] sm:$0xff]
  %v509 = vld [vmem:[%s20 + $0x60] sm:$0xff]
  %v510 = vld [vmem:[%s20 + $0x68] sm:$0xff]
  %v511 = vld [vmem:[%s20 + $0x70] sm:$0xff]
  %v512 = vld [vmem:[%s20 + $0x78] sm:$0xff]
  %v513 = vld [vmem:[%s21] sm:$0xff]
  %v514 = vld [vmem:[%s21 + $0x8] sm:$0xff]
  %v515 = vld [vmem:[%s21 + $0x10] sm:$0xff]
  %v516 = vld [vmem:[%s21 + $0x18] sm:$0xff]
  %v517 = vld [vmem:[%s21 + $0x20] sm:$0xff]
  %v518 = vld [vmem:[%s21 + $0x28] sm:$0xff]
  %v519 = vld [vmem:[%s21 + $0x30] sm:$0xff]
  %v520 = vld [vmem:[%s21 + $0x38] sm:$0xff]
  %v521 = vld [vmem:[%s21 + $0x40] sm:$0xff]
  %v522 = vld [vmem:[%s21 + $0x48] sm:$0xff]
  %v523 = vld [vmem:[%s21 + $0x50] sm:$0xff]
  %v524 = vld [vmem:[%s21 + $0x58] sm:$0xff]
  %v525 = vld [vmem:[%s21 + $0x60] sm:$0xff]
  %v526 = vld [vmem:[%s21 + $0x68] sm:$0xff]
  %v527 = vld [vmem:[%s21 + $0x70] sm:$0xff]
  %v528 = vld [vmem:[%s21 + $0x78] sm:$0xff]
  %v529 = vld [vmem:[%s22] sm:$0x1]
  %v530 = vld [vmem:[%s23] sm:$0x1]
  %v531 = vld [vmem:[%s24] sm:$0xff]
  %v532 = vld [vmem:[%s24 + $0x8] sm:$0xff]
  %v533 = vld [vmem:[%s24 + $0x10] sm:$0xff]
  %v534 = vld [vmem:[%s24 + $0x18] sm:$0xff]
  %v535 = vld [vmem:[%s24 + $0x20] sm:$0xff]
  %v536 = vld [vmem:[%s24 + $0x28] sm:$0xff]
  %v537 = vld [vmem:[%s24 + $0x30] sm:$0xff]
  %v538 = vld [vmem:[%s24 + $0x38] sm:$0xff]
  %v539 = vld [vmem:[%s24 + $0x40] sm:$0xff]
  %v540 = vld [vmem:[%s24 + $0x48] sm:$0xff]
  %v541 = vld [vmem:[%s24 + $0x50] sm:$0xff]
  %v542 = vld [vmem:[%s24 + $0x58] sm:$0xff]
  %v543 = vld [vmem:[%s24 + $0x60] sm:$0xff]
  %v544 = vld [vmem:[%s24 + $0x68] sm:$0xff]
  %v545 = vld [vmem:[%s24 + $0x70] sm:$0xff]
  %v546 = vld [vmem:[%s24 + $0x78] sm:$0xff]
  %v547 = vld [vmem:[%s25] sm:$0x1]
  %v548 = vmul.f32 %v513, %v531
  %v549 = vmul.f32 %v514, %v532
  %v550 = vmul.f32 %v515, %v533
  %v551 = vmul.f32 %v516, %v534
  %v552 = vmul.f32 %v517, %v535
  %v553 = vmul.f32 %v518, %v536
  %v554 = vmul.f32 %v519, %v537
  %v555 = vmul.f32 %v520, %v538
  %v556 = vmul.f32 %v521, %v539
  %v557 = vmul.f32 %v522, %v540
  %v558 = vmul.f32 %v523, %v541
  %v559 = vmul.f32 %v524, %v542
  %v560 = vmul.f32 %v525, %v543
  %v561 = vmul.f32 %v526, %v544
  %v562 = vmul.f32 %v527, %v545
  %v563 = vmul.f32 %v528, %v546
  %v564 = vadd.f32 %v497, %v548
  %v565 = vadd.f32 %v498, %v549
  %v566 = vadd.f32 %v499, %v550
  %v567 = vadd.f32 %v500, %v551
  %v568 = vadd.f32 %v501, %v552
  %v569 = vadd.f32 %v502, %v553
  %v570 = vadd.f32 %v503, %v554
  %v571 = vadd.f32 %v504, %v555
  %v572 = vadd.f32 %v505, %v556
  %v573 = vadd.f32 %v506, %v557
  %v574 = vadd.f32 %v507, %v558
  %v575 = vadd.f32 %v508, %v559
  %v576 = vadd.f32 %v509, %v560
  %v577 = vadd.f32 %v510, %v561
  %v578 = vadd.f32 %v511, %v562
  %v579 = vadd.f32 %v512, %v563
  %v580 = vmul.f32 %v530, %v547
  %v581 = vadd.f32 %v529, %v580
  %v583 = vperm.slane %v581, 0
  %585 = vmatpush.msra.mxu0 %v579
  %586 = vmatpush.msra.mxu0 %v578
  %587 = vmatpush.msra.mxu0 %v577
  %588 = vmatpush.msra.mxu0 %v576
  %589 = vmatpush.msra.mxu0 %v575
  %590 = vmatpush.msra.mxu0 %v574
  %591 = vmatpush.msra.mxu0 %v573
  %592 = vmatpush.msra.mxu0 %v572
  %593 = vmatpush.msra.mxu0 %v571
  %594 = vmatpush.msra.mxu0 %v570
  %595 = vmatpush.msra.mxu0 %v569
  %596 = vmatpush.msra.mxu0 %v568
  %597 = vmatpush.msra.mxu0 %v567
  %598 = vmatpush.msra.mxu0 %v566
  %599 = vmatpush.msra.mxu0 %v565
  %600 = vmatpush.msra.mxu0 %v564
  %601 = vmatmul.f32.gmra.mxu0 %v496
  %v602 = vpop.f32.mrf.mxu0
  %v603 = vadd.f32 %v583, %v602
  %604 = vdwg.mxu0
  %605 = vst [vmem:[%s26] sm:$0xff] %v603
  // Predicated region
  $region102: #{_bnn_apply_jit.1} parent=0 // pred_check
    _
  $region103: #{_bnn_apply_jit.1} parent=0 // pred_check_branch
    %607 = sbr.rel (0) target = $region105
  $region104: #{_bnn_apply_jit.1} parent=0 // pred_region
    _
  $region105: #{_bnn_apply_jit.1} parent=0 // pred_fallthru
    _
  // Predicated region
  $region106: #{_bnn_apply_jit.1} parent=0 // pred_check
    _
  $region107: #{_bnn_apply_jit.1} parent=0 // pred_check_branch
    %609 = sbr.rel (0) target = $region109
  $region108: #{_bnn_apply_jit.1} parent=0 // pred_region
    _
  $region109: #{_bnn_apply_jit.1} parent=0 // pred_fallthru
    _

</llo_original>
